<compile_context>
chip_gen: v5e
topology: v5e:2x2
jax: 0.10.0
libtpu: 0.0.40
codegen_flags: <defaults>
</compile_context>

<pallas_src>
import functools

import jax
import jax.numpy as jnp
from jax.experimental import pallas as pl
from jax.experimental.pallas import tpu as pltpu  # noqa: F401

LANE = 128          # TPU lane width; merged head output is padded to a multiple of this.
_BF16_MIN_N = 512   # below this node count, keep f32 MXU operands (tolerance + latency-bound anyway)


def _fused_encoder_kernel(*refs, num_layers, mxu_dtype):
    """refs = (a, x, [w_i, b_i]*num_layers, w_head, b_head, out)."""
    a_ref, x_ref = refs[0], refs[1]
    layer_refs = refs[2:2 + 2 * num_layers]
    wh_ref, bh_ref = refs[2 + 2 * num_layers], refs[3 + 2 * num_layers]
    o_ref = refs[4 + 2 * num_layers]

    a = a_ref[...].astype(mxu_dtype)      # no-op when mxu_dtype == f32
    h = x_ref[...]                        # stays f32 between layers (epilogue output)

    for i in range(num_layers):
        w_ref = layer_refs[2 * i]
        b_ref = layer_refs[2 * i + 1]
        f_in, f_out = w_ref.shape
        w = w_ref[...].astype(mxu_dtype)
        if f_out < f_in:
            # Transform first: the N^2 A_hat matmul contracts with an [N, f_out] operand.
            hw = jnp.dot(h.astype(mxu_dtype), w, preferred_element_type=jnp.float32)
            h = jnp.dot(a, hw.astype(mxu_dtype), preferred_element_type=jnp.float32)
        else:
            # Aggregate first: the N^2 A_hat matmul contracts with an [N, f_in] operand.
            ah = jnp.dot(a, h.astype(mxu_dtype), preferred_element_type=jnp.float32)
            h = jnp.dot(ah.astype(mxu_dtype), w, preferred_element_type=jnp.float32)
        # f32 bias + ReLU epilogue on the VPU (v5e has no bf16 VPU).
        h = jnp.maximum(h + b_ref[...], 0.0)

    # Fused mu/logstd heads (lane-padded output width > hidden) -> aggregate first.
    ah = jnp.dot(a, h.astype(mxu_dtype), preferred_element_type=jnp.float32)
    out = jnp.dot(ah.astype(mxu_dtype), wh_ref[...].astype(mxu_dtype),
                  preferred_element_type=jnp.float32) + bh_ref[...]
    o_ref[...] = out.astype(o_ref.dtype)


def pack_params(params, lane=LANE):
    """One-time packing of parameters into the kernel's layout (done at init, not per call)."""
    convs = [(w.astype(jnp.float32), b.reshape(1, -1).astype(jnp.float32))
             for (w, b) in params["convs"]]
    w_mu, b_mu = params["mu"]
    w_ls, b_ls = params["logstd"]
    out_ch = int(w_mu.shape[1])
    two_out = 2 * out_ch
    padded = max(lane, ((two_out + lane - 1) // lane) * lane)
    # Merge the two heads and zero-pad to a lane-dense output slab.
    head_w = jnp.pad(jnp.concatenate([w_mu, w_ls], axis=1).astype(jnp.float32),
                     ((0, 0), (0, padded - two_out)))
    head_b = jnp.pad(jnp.concatenate([b_mu, b_ls], axis=0).astype(jnp.float32),
                     (0, padded - two_out)).reshape(1, padded)
    packed = {"convs": convs, "head_w": head_w, "head_b": head_b}
    return packed, out_ch


@functools.partial(jax.jit, static_argnames=("out_ch",))
def variational_gcn_encoder(x, a_hat, packed, *, out_ch):
    """Fused forward pass (jitted): returns (mu, logstd)."""
    n, f_in = x.shape
    convs = packed["convs"]
    num_layers = len(convs)
    head_w = packed["head_w"]
    head_b = packed["head_b"]
    hidden, padded = head_w.shape

    # Size-gated bf16 MXU operands (accumulation stays f32; neutral/avoided at tiny N).
    mxu_dtype = jnp.bfloat16 if n >= _BF16_MIN_N else jnp.float32

    # Full-array blocks: A_hat, h, and all weights stay resident in VMEM for the single
    # fused invocation (no grid -> no per-step overhead, lane-dense [N, 128] output slab).
    in_specs = [
        pl.BlockSpec((n, n), lambda: (0, 0)),
        pl.BlockSpec((n, f_in), lambda: (0, 0)),
    ]
    args = [a_hat, x]
    for (w, b) in convs:
        fi, fo = w.shape
        in_specs += [
            pl.BlockSpec((fi, fo), lambda: (0, 0)),
            pl.BlockSpec((1, fo), lambda: (0, 0)),
        ]
        args += [w, b]
    in_specs += [
        pl.BlockSpec((hidden, padded), lambda: (0, 0)),
        pl.BlockSpec((1, padded), lambda: (0, 0)),
    ]
    args += [head_w, head_b]

    # Advisory cost estimate for XLA scheduling (all static shapes).
    flops = 0
    for (w, _) in convs:
        fi, fo = w.shape
        flops += 2 * (n * n * min(fi, fo) + n * fi * fo)
    flops += 2 * (n * n * hidden + n * hidden * padded)
    bytes_accessed = 4 * (a_hat.size + x.size
                          + sum(w.size + b.size for (w, b) in convs)
                          + head_w.size + head_b.size + n * padded)
    cost = pl.CostEstimate(flops=flops, transcendentals=0, bytes_accessed=bytes_accessed)

    kernel = functools.partial(_fused_encoder_kernel,
                               num_layers=num_layers, mxu_dtype=mxu_dtype)
    out = pl.pallas_call(
        kernel,
        out_shape=jax.ShapeDtypeStruct((n, padded), jnp.float32),
        in_specs=in_specs,
        out_specs=pl.BlockSpec((n, padded), lambda: (0, 0)),
        cost_estimate=cost,
    )(*args)

    # Slice the contiguous slab under the same jit so XLA fuses it (no extra dispatches).
    return out[:, :out_ch], out[:, out_ch:2 * out_ch]


def gcn_norm_adj(edge_index, num_nodes):
    """Dense A_hat = D^{-1/2} (A + I) D^{-1/2}; edges flow src (row 0) -> dst (row 1).

    Duplicate edges accumulate (matches PyG GCNConv on a non-coalesced edge_index).
    """
    src = edge_index[0]
    dst = edge_index[1]
    a = jnp.zeros((num_nodes, num_nodes), jnp.float32)
    a = a.at[dst, src].add(1.0)
    a = a + jnp.eye(num_nodes, dtype=jnp.float32)  # add self-loops
    deg = a.sum(axis=1)
    d_inv_sqrt = jnp.where(deg > 0.0, jax.lax.rsqrt(deg), 0.0)
    return d_inv_sqrt[:, None] * a * d_inv_sqrt[None, :]


def _glorot(key, shape):
    fan_in, fan_out = shape
    limit = jnp.sqrt(6.0 / (fan_in + fan_out))
    return jax.random.uniform(key, shape, jnp.float32, minval=-limit, maxval=limit)


def init_params(key, in_channels, hidden_channels, out_channels, num_layers=2):
    keys = jax.random.split(key, num_layers + 2)
    dims = [in_channels] + [hidden_channels] * num_layers
    convs = []
    for i in range(num_layers):
        w = _glorot(keys[i], (dims[i], dims[i + 1]))
        b = jnp.zeros((dims[i + 1],), jnp.float32)
        convs.append((w, b))
    w_mu = _glorot(keys[-2], (hidden_channels, out_channels))
    b_mu = jnp.zeros((out_channels,), jnp.float32)
    w_ls = _glorot(keys[-1], (hidden_channels, out_channels))
    b_ls = jnp.zeros((out_channels,), jnp.float32)
    return {"convs": convs, "mu": (w_mu, b_mu), "logstd": (w_ls, b_ls)}


if __name__ == "__main__":
    key = jax.random.PRNGKey(0)
    k_x, k_edge, k_param = jax.random.split(key, 3)

    num_nodes = 64
    in_channels = 16
    hidden_channels = 32
    out_channels = 8

    # Node features x: [N, in_channels]
    x = jax.random.normal(k_x, (num_nodes, in_channels), jnp.float32)

    # Deterministic undirected edge set: a ring plus a few random chords (both directions).
    idx = jnp.arange(num_nodes)
    ring_src = jnp.concatenate([idx, (idx + 1) % num_nodes])
    ring_dst = jnp.concatenate([(idx + 1) % num_nodes, idx])
    rnd = jax.random.randint(k_edge, (2, 32), 0, num_nodes)
    extra_src = jnp.concatenate([rnd[0], rnd[1]])
    extra_dst = jnp.concatenate([rnd[1], rnd[0]])
    edge_index = jnp.stack(
        [jnp.concatenate([ring_src, extra_src]), jnp.concatenate([ring_dst, extra_dst])]
    )

    a_hat = gcn_norm_adj(edge_index, num_nodes)
    params = init_params(k_param, in_channels, hidden_channels, out_channels, num_layers=2)

    # One-time packing (hoisted out of the per-call path).
    packed, out_ch = pack_params(params)

    mu, logstd = variational_gcn_encoder(x, a_hat, packed, out_ch=out_ch)
    jax.block_until_ready((mu, logstd))

    assert mu.shape == (num_nodes, out_channels)
    assert logstd.shape == (num_nodes, out_channels)

    # Plain-JAX reference check (canonical A_hat @ (X @ W) ordering).
    def ref_layer(a, h, w, b, relu):
        o = a @ (h @ w) + b[None, :]
        return jnp.maximum(o, 0.0) if relu else o

    h_ref = x
    for (w, b) in params["convs"]:
        h_ref = ref_layer(a_hat, h_ref, w, b, True)
    mu_ref = ref_layer(a_hat, h_ref, *params["mu"], relu=False)
    ls_ref = ref_layer(a_hat, h_ref, *params["logstd"], relu=False)
    assert jnp.allclose(mu, mu_ref, atol=1e-3, rtol=1e-3)
    assert jnp.allclose(logstd, ls_ref, atol=1e-3, rtol=1e-3)

    print("KERNEL_OK")
</pallas_src>

<mosaic_0001>
module attributes {stable_mosaic.version = 11 : i64} {
  func.func @_fused_encoder_kernel(%arg0: memref<64x64xf32, #tpu.memory_space<vmem>>, %arg1: memref<64x16xf32, #tpu.memory_space<vmem>>, %arg2: memref<16x32xf32, #tpu.memory_space<vmem>>, %arg3: memref<1x32xf32, #tpu.memory_space<vmem>>, %arg4: memref<32x32xf32, #tpu.memory_space<vmem>>, %arg5: memref<1x32xf32, #tpu.memory_space<vmem>>, %arg6: memref<32x128xf32, #tpu.memory_space<vmem>>, %arg7: memref<1x128xf32, #tpu.memory_space<vmem>>, %arg8: memref<64x128xf32, #tpu.memory_space<vmem>>) attributes {dimension_semantics = [], scalar_prefetch = 0 : i64, scratch_operands = 0 : i64, tpu.core_type = #tpu.core_type<tc>} {
    %c0 = arith.constant 0 : index
    %c0_0 = arith.constant 0 : index
    %0 = vector.load %arg0[%c0, %c0_0] : memref<64x64xf32, #tpu.memory_space<vmem>>, vector<64x64xf32>
    %c0_1 = arith.constant 0 : index
    %c0_2 = arith.constant 0 : index
    %1 = vector.load %arg1[%c0_1, %c0_2] : memref<64x16xf32, #tpu.memory_space<vmem>>, vector<64x16xf32>
    %c0_3 = arith.constant 0 : index
    %c0_4 = arith.constant 0 : index
    %2 = vector.load %arg2[%c0_3, %c0_4] : memref<16x32xf32, #tpu.memory_space<vmem>>, vector<16x32xf32>
    %cst = arith.constant dense<0.000000e+00> : vector<64x16xf32>
    %3 = tpu.matmul %0, %1, %cst {dimension_numbers = #tpu.dot_dimension_numbers<[1], [0], [0], [1], [0, 0, 1, 1], [], []>} : vector<64x64xf32>, vector<64x16xf32>, vector<64x16xf32> -> vector<64x16xf32>
    %cst_5 = arith.constant dense<0.000000e+00> : vector<64x32xf32>
    %4 = tpu.matmul %3, %2, %cst_5 {dimension_numbers = #tpu.dot_dimension_numbers<[1], [0], [0], [1], [0, 0, 1, 1], [], []>} : vector<64x16xf32>, vector<16x32xf32>, vector<64x32xf32> -> vector<64x32xf32>
    %c0_6 = arith.constant 0 : index
    %c0_7 = arith.constant 0 : index
    %5 = vector.load %arg3[%c0_6, %c0_7] : memref<1x32xf32, #tpu.memory_space<vmem>>, vector<1x32xf32>
    %6 = vector.broadcast %5 : vector<1x32xf32> to vector<64x32xf32>
    %7 = arith.addf %4, %6 : vector<64x32xf32>
    %cst_8 = arith.constant 0.000000e+00 : f32
    %8 = vector.broadcast %cst_8 : f32 to vector<64x32xf32>
    %9 = arith.maximumf %7, %8 : vector<64x32xf32>
    %c0_9 = arith.constant 0 : index
    %c0_10 = arith.constant 0 : index
    %10 = vector.load %arg4[%c0_9, %c0_10] : memref<32x32xf32, #tpu.memory_space<vmem>>, vector<32x32xf32>
    %cst_11 = arith.constant dense<0.000000e+00> : vector<64x32xf32>
    %11 = tpu.matmul %0, %9, %cst_11 {dimension_numbers = #tpu.dot_dimension_numbers<[1], [0], [0], [1], [0, 0, 1, 1], [], []>} : vector<64x64xf32>, vector<64x32xf32>, vector<64x32xf32> -> vector<64x32xf32>
    %cst_12 = arith.constant dense<0.000000e+00> : vector<64x32xf32>
    %12 = tpu.matmul %11, %10, %cst_12 {dimension_numbers = #tpu.dot_dimension_numbers<[1], [0], [0], [1], [0, 0, 1, 1], [], []>} : vector<64x32xf32>, vector<32x32xf32>, vector<64x32xf32> -> vector<64x32xf32>
    %c0_13 = arith.constant 0 : index
    %c0_14 = arith.constant 0 : index
    %13 = vector.load %arg5[%c0_13, %c0_14] : memref<1x32xf32, #tpu.memory_space<vmem>>, vector<1x32xf32>
    %14 = vector.broadcast %13 : vector<1x32xf32> to vector<64x32xf32>
    %15 = arith.addf %12, %14 : vector<64x32xf32>
    %cst_15 = arith.constant 0.000000e+00 : f32
    %16 = vector.broadcast %cst_15 : f32 to vector<64x32xf32>
    %17 = arith.maximumf %15, %16 : vector<64x32xf32>
    %cst_16 = arith.constant dense<0.000000e+00> : vector<64x32xf32>
    %18 = tpu.matmul %0, %17, %cst_16 {dimension_numbers = #tpu.dot_dimension_numbers<[1], [0], [0], [1], [0, 0, 1, 1], [], []>} : vector<64x64xf32>, vector<64x32xf32>, vector<64x32xf32> -> vector<64x32xf32>
    %c0_17 = arith.constant 0 : index
    %c0_18 = arith.constant 0 : index
    %19 = vector.load %arg6[%c0_17, %c0_18] : memref<32x128xf32, #tpu.memory_space<vmem>>, vector<32x128xf32>
    %cst_19 = arith.constant dense<0.000000e+00> : vector<64x128xf32>
    %20 = tpu.matmul %18, %19, %cst_19 {dimension_numbers = #tpu.dot_dimension_numbers<[1], [0], [0], [1], [0, 0, 1, 1], [], []>} : vector<64x32xf32>, vector<32x128xf32>, vector<64x128xf32> -> vector<64x128xf32>
    %c0_20 = arith.constant 0 : index
    %c0_21 = arith.constant 0 : index
    %21 = vector.load %arg7[%c0_20, %c0_21] : memref<1x128xf32, #tpu.memory_space<vmem>>, vector<1x128xf32>
    %22 = vector.broadcast %21 : vector<1x128xf32> to vector<64x128xf32>
    %23 = arith.addf %20, %22 : vector<64x128xf32>
    %c0_22 = arith.constant 0 : index
    %c0_23 = arith.constant 0 : index
    %24 = vector.load %arg8[%c0_22, %c0_23] : memref<64x128xf32, #tpu.memory_space<vmem>>, vector<64x128xf32>
    tpu.vector_store %arg8[%c0_22, %c0_23], %23 {strides = array<i32>} : memref<64x128xf32, #tpu.memory_space<vmem>>, vector<64x128xf32>,
    return
  }
}

</mosaic_0001>

<llo_original>
// kernel: variational_gcn_encoder.1
$region0: #{variational_gcn_encoder.1}
  #allocation0 [shape = 'u32[]', space=smem, size = 0x4, offset = 0x4, fixed_abs, tag = 'smem constant byte address 0x4 - core index']
  #allocation1 [shape = 'u32[72,128]{1,0:T(1,128)}', space=vmem, size = 0x9000, scoped, tag = 'internal scratch']
  %s0 = inlined_call_operand.vmem [shape: f32[64,64], index: 0, kind: input, shape index: {}]
  %s1 = inlined_call_operand.vmem [shape: f32[64,16], index: 1, kind: input, shape index: {}]
  %s2 = inlined_call_operand.vmem [shape: f32[16,32], index: 2, kind: input, shape index: {}]
  %s3 = inlined_call_operand.vmem [shape: f32[1,32], index: 3, kind: input, shape index: {}]
  %s4 = inlined_call_operand.hbm [shape: f32[32,32], index: 4, kind: input, shape index: {}]
  %s5 = inlined_call_operand.vmem [shape: f32[1,32], index: 5, kind: input, shape index: {}]
  %s6 = inlined_call_operand.hbm [shape: f32[32,128], index: 6, kind: input, shape index: {}]
  %s7 = inlined_call_operand.vmem [shape: f32[1,128], index: 7, kind: input, shape index: {}]
  %s8 = inlined_call_operand.vmem [shape: f32[64,128], index: 8, kind: output, shape index: {}]
  %s9 = sld [smem:[#allocation0]]
  $region50: #{variational_gcn_encoder.1} parent=0
    _
  %s11 = ssub.s32 1, %s9
  %s12 = scalar_select 0, %s11, %s9
  $region1: #{variational_gcn_encoder.1} parent=0
    #allocation2 [shape = 'u8[16384]{0}', space=vmem, size = 0x4000, scoped, tag = 'input window, operand 4, single buffered']
    #allocation3 [shape = 's32[1]{0}', space=sflag, size = 0x4, scoped, tag = 'scoped memory for variational_gcn_encoder.1']
    #allocation4 [shape = 'u8[16384]{0}', space=vmem, size = 0x4000, scoped, tag = 'input window, operand 6, single buffered']
    #allocation5 [shape = 's32[1]{0}', space=sflag, size = 0x4, scoped, tag = 'scoped memory for variational_gcn_encoder.1']
    %13 = vsyncpa [#allocation3], 0
    %14 = vsyncpa [#allocation5], 0
    // Predicated region
    $region2: #{variational_gcn_encoder.1} parent=1 // pred_check
      _
    $region3: #{variational_gcn_encoder.1} parent=1 // pred_check_branch
      %16 = sbr.rel (0) target = $region5
    $region4: #{variational_gcn_encoder.1} parent=1 // pred_region
      _
    $region5: #{variational_gcn_encoder.1} parent=1 // pred_fallthru
      _
    // Predicated region
    $region6: #{variational_gcn_encoder.1} parent=1 // pred_check
      _
    $region7: #{variational_gcn_encoder.1} parent=1 // pred_check_branch
      %18 = sbr.rel (0) target = $region9
    $region8: #{variational_gcn_encoder.1} parent=1 // pred_region
      _
    $region9: #{variational_gcn_encoder.1} parent=1 // pred_fallthru
      _
    // Predicated region
    $region10: #{variational_gcn_encoder.1} parent=1 // pred_check
      _
    $region11: #{variational_gcn_encoder.1} parent=1 // pred_check_branch
      %20 = sbr.rel (0) target = $region13
    $region12: #{variational_gcn_encoder.1} parent=1 // pred_region
      _
    $region13: #{variational_gcn_encoder.1} parent=1 // pred_fallthru
      _
    // Predicated region
    $region14: #{variational_gcn_encoder.1} parent=1 // pred_check
      _
    $region15: #{variational_gcn_encoder.1} parent=1 // pred_check_branch
      %22 = sbr.rel (0) target = $region17
    $region16: #{variational_gcn_encoder.1} parent=1 // pred_region
      _
    $region17: #{variational_gcn_encoder.1} parent=1 // pred_fallthru
      _
    // Predicated region
    $region18: #{variational_gcn_encoder.1} parent=1 // pred_check
      _
    $region19: #{variational_gcn_encoder.1} parent=1 // pred_check_branch
      %24 = sbr.rel (0) target = $region21
    $region20: #{variational_gcn_encoder.1} parent=1 // pred_region
      %26 = vsyncadd [#allocation3], 0
      %s27 = sshll.u32 %s4, 4
      %s28 = int_to_ptr.hbm [resolvable:$true] %s27
      %s29 = sshll.u32 [#allocation2], 4
      %s30 = int_to_ptr.vmem [resolvable:$true] %s29
      %35 = dma.hbm_to_vmem [thread:$0]  %s28, 512, %s30, [#allocation3], 128, 128, 8
    $region21: #{variational_gcn_encoder.1} parent=1 // pred_fallthru
      _
    // Predicated region
    $region22: #{variational_gcn_encoder.1} parent=1 // pred_check
      _
    $region23: #{variational_gcn_encoder.1} parent=1 // pred_check_branch
      %37 = sbr.rel (0) target = $region25
    $region24: #{variational_gcn_encoder.1} parent=1 // pred_region
      _
    $region25: #{variational_gcn_encoder.1} parent=1 // pred_fallthru
      _
    // Predicated region
    $region26: #{variational_gcn_encoder.1} parent=1 // pred_check
      _
    $region27: #{variational_gcn_encoder.1} parent=1 // pred_check_branch
      %39 = sbr.rel (0) target = $region29
    $region28: #{variational_gcn_encoder.1} parent=1 // pred_region
      %41 = vsyncadd [#allocation5], 0
      %s42 = sshll.u32 %s6, 4
      %s43 = int_to_ptr.hbm [resolvable:$true] %s42
      %s44 = sshll.u32 [#allocation4], 4
      %s45 = int_to_ptr.vmem [resolvable:$true] %s44
      %50 = dma.hbm_to_vmem [thread:$0]  %s43, 512, %s45, [#allocation5], 128, 128, 8
    $region29: #{variational_gcn_encoder.1} parent=1 // pred_fallthru
      _
    // Predicated region
    $region30: #{variational_gcn_encoder.1} parent=1 // pred_check
      _
    $region31: #{variational_gcn_encoder.1} parent=1 // pred_check_branch
      %52 = sbr.rel (0) target = $region33
    $region32: #{variational_gcn_encoder.1} parent=1 // pred_region
      _
    $region33: #{variational_gcn_encoder.1} parent=1 // pred_fallthru
      _
    // Predicated region
    $region34: #{variational_gcn_encoder.1} parent=1 // pred_check
      _
    $region35: #{variational_gcn_encoder.1} parent=1 // pred_check_branch
      %54 = sbr.rel (0) target = $region37
    $region36: #{variational_gcn_encoder.1} parent=1 // pred_region
      %56 = dma.done [#allocation3], 512
    $region37: #{variational_gcn_encoder.1} parent=1 // pred_fallthru
      _
    // Predicated region
    $region38: #{variational_gcn_encoder.1} parent=1 // pred_check
      _
    $region39: #{variational_gcn_encoder.1} parent=1 // pred_check_branch
      %58 = sbr.rel (0) target = $region41
    $region40: #{variational_gcn_encoder.1} parent=1 // pred_region
      %60 = dma.done [#allocation5], 512
    $region41: #{variational_gcn_encoder.1} parent=1 // pred_fallthru
      _
    %v61 = vld [vmem:[%s0] sm:$0xff]
    %v62 = vld [vmem:[%s0 + $0x8] sm:$0xff]
    %v63 = vld [vmem:[%s0 + $0x10] sm:$0xff]
    %v64 = vld [vmem:[%s0 + $0x18] sm:$0xff]
    %v65 = vld [vmem:[%s0 + $0x20] sm:$0xff]
    %v66 = vld [vmem:[%s0 + $0x28] sm:$0xff]
    %v67 = vld [vmem:[%s0 + $0x30] sm:$0xff]
    %v68 = vld [vmem:[%s0 + $0x38] sm:$0xff]
    %v69 = vld [vmem:[%s1] sm:$0xff]
    %v70 = vld [vmem:[%s1 + $0x8] sm:$0xff]
    %v71 = vld [vmem:[%s1 + $0x10] sm:$0xff]
    %v72 = vld [vmem:[%s1 + $0x18] sm:$0xff]
    %v73 = vld [vmem:[%s1 + $0x20] sm:$0xff]
    %v74 = vld [vmem:[%s1 + $0x28] sm:$0xff]
    %v75 = vld [vmem:[%s1 + $0x30] sm:$0xff]
    %v76 = vld [vmem:[%s1 + $0x38] sm:$0xff]
    %v77 = vld [vmem:[%s2] sm:$0xff]
    %v78 = vld [vmem:[%s2 + $0x8] sm:$0xff]
    %vm79 = vcmask 523264
    %v81 = vsel %vm79, %v61, 0
    %v84 = vsel %vm79, %v62, 0
    %v87 = vsel %vm79, %v63, 0
    %v90 = vsel %vm79, %v64, 0
    %v93 = vsel %vm79, %v65, 0
    %v96 = vsel %vm79, %v66, 0
    %v99 = vsel %vm79, %v67, 0
    %v102 = vsel %vm79, %v68, 0
    %104 = vmatpush.msra.mxu0 0.0
    %105 = vmatpush.msra.mxu0 0.0
    %106 = vmatpush.msra.mxu0 0.0
    %107 = vmatpush.msra.mxu0 0.0
    %108 = vmatpush.msra.mxu0 0.0
    %109 = vmatpush.msra.mxu0 0.0
    %110 = vmatpush.msra.mxu0 0.0
    %111 = vmatpush.msra.mxu0 0.0
    %112 = vmatpush.msra.mxu0 %v76
    %113 = vmatpush.msra.mxu0 %v75
    %114 = vmatpush.msra.mxu0 %v74
    %115 = vmatpush.msra.mxu0 %v73
    %116 = vmatpush.msra.mxu0 %v72
    %117 = vmatpush.msra.mxu0 %v71
    %118 = vmatpush.msra.mxu0 %v70
    %119 = vmatpush.msra.mxu0 %v69
    %120 = vmatmul.f32.gmra.mxu0 %v81
    %v121 = vpop.f32.mrf.mxu0
    %v122 = vadd.f32 0.0, %v121
    %123 = vmatmul.f32.gmra.mxu0 %v84
    %v124 = vpop.f32.mrf.mxu0
    %v125 = vadd.f32 0.0, %v124
    %126 = vmatmul.f32.gmra.mxu0 %v87
    %v127 = vpop.f32.mrf.mxu0
    %v128 = vadd.f32 0.0, %v127
    %129 = vmatmul.f32.gmra.mxu0 %v90
    %v130 = vpop.f32.mrf.mxu0
    %v131 = vadd.f32 0.0, %v130
    %132 = vmatmul.f32.gmra.mxu0 %v93
    %v133 = vpop.f32.mrf.mxu0
    %v134 = vadd.f32 0.0, %v133
    %135 = vmatmul.f32.gmra.mxu0 %v96
    %v136 = vpop.f32.mrf.mxu0
    %v137 = vadd.f32 0.0, %v136
    %138 = vmatmul.f32.gmra.mxu0 %v99
    %v139 = vpop.f32.mrf.mxu0
    %v140 = vadd.f32 0.0, %v139
    %141 = vmatmul.f32.gmra.mxu0 %v102
    %v142 = vpop.f32.mrf.mxu0
    %v143 = vadd.f32 0.0, %v142
    %144 = vdwg.mxu0
    %v145 = vld [vmem:[%s3] sm:$0x1]
    %v147 = vperm.slane %v145, 0
    %vm149 = vcmask 130048
    %v151 = vsel %vm149, %v122, 0
    %v154 = vsel %vm149, %v125, 0
    %v157 = vsel %vm149, %v128, 0
    %v160 = vsel %vm149, %v131, 0
    %v163 = vsel %vm149, %v134, 0
    %v166 = vsel %vm149, %v137, 0
    %v169 = vsel %vm149, %v140, 0
    %v172 = vsel %vm149, %v143, 0
    %174 = vmatpush.msra.mxu0 0.0
    %175 = vmatpush.msra.mxu0 0.0
    %176 = vmatpush.msra.mxu0 0.0
    %177 = vmatpush.msra.mxu0 0.0
    %178 = vmatpush.msra.mxu0 0.0
    %179 = vmatpush.msra.mxu0 0.0
    %180 = vmatpush.msra.mxu0 0.0
    %181 = vmatpush.msra.mxu0 0.0
    %182 = vmatpush.msra.mxu0 0.0
    %183 = vmatpush.msra.mxu0 0.0
    %184 = vmatpush.msra.mxu0 0.0
    %185 = vmatpush.msra.mxu0 0.0
    %186 = vmatpush.msra.mxu0 0.0
    %187 = vmatpush.msra.mxu0 0.0
    %188 = vmatpush.msra.mxu0 %v78
    %189 = vmatpush.msra.mxu0 %v77
    %190 = vmatmul.f32.gmra.mxu0 %v151
    %v191 = vpop.f32.mrf.mxu0
    %v192 = vadd.f32 %v147, %v191
    %193 = vmatmul.f32.gmra.mxu0 %v154
    %v194 = vpop.f32.mrf.mxu0
    %v195 = vadd.f32 %v147, %v194
    %196 = vmatmul.f32.gmra.mxu0 %v157
    %v197 = vpop.f32.mrf.mxu0
    %v198 = vadd.f32 %v147, %v197
    %199 = vmatmul.f32.gmra.mxu0 %v160
    %v200 = vpop.f32.mrf.mxu0
    %v201 = vadd.f32 %v147, %v200
    %202 = vmatmul.f32.gmra.mxu0 %v163
    %v203 = vpop.f32.mrf.mxu0
    %v204 = vadd.f32 %v147, %v203
    %205 = vmatmul.f32.gmra.mxu0 %v166
    %v206 = vpop.f32.mrf.mxu0
    %v207 = vadd.f32 %v147, %v206
    %208 = vmatmul.f32.gmra.mxu0 %v169
    %v209 = vpop.f32.mrf.mxu0
    %v210 = vadd.f32 %v147, %v209
    %211 = vmatmul.f32.gmra.mxu0 %v172
    %v212 = vpop.f32.mrf.mxu0
    %v213 = vadd.f32 %v147, %v212
    %214 = vdwg.mxu0
    %v215 = vmax.f32 %v192, 0.0
    %v216 = vmax.f32 %v195, 0.0
    %v217 = vmax.f32 %v198, 0.0
    %v218 = vmax.f32 %v201, 0.0
    %v219 = vmax.f32 %v204, 0.0
    %v220 = vmax.f32 %v207, 0.0
    %v221 = vmax.f32 %v210, 0.0
    %v222 = vmax.f32 %v213, 0.0
    %v223 = vld [vmem:[#allocation2] sm:$0xff]
    %v224 = vld [vmem:[#allocation2 + $0x8] sm:$0xff]
    %v225 = vld [vmem:[#allocation2 + $0x10] sm:$0xff]
    %v226 = vld [vmem:[#allocation2 + $0x18] sm:$0xff]
    %227 = vmatpush.msra.mxu0 0.0
    %228 = vmatpush.msra.mxu0 0.0
    %229 = vmatpush.msra.mxu0 0.0
    %230 = vmatpush.msra.mxu0 0.0
    %231 = vmatpush.msra.mxu0 0.0
    %232 = vmatpush.msra.mxu0 0.0
    %233 = vmatpush.msra.mxu0 0.0
    %234 = vmatpush.msra.mxu0 0.0
    %235 = vmatpush.msra.mxu0 %v222
    %236 = vmatpush.msra.mxu0 %v221
    %237 = vmatpush.msra.mxu0 %v220
    %238 = vmatpush.msra.mxu0 %v219
    %239 = vmatpush.msra.mxu0 %v218
    %240 = vmatpush.msra.mxu0 %v217
    %241 = vmatpush.msra.mxu0 %v216
    %242 = vmatpush.msra.mxu0 %v215
    %243 = vmatmul.f32.gmra.mxu0 %v81
    %v244 = vpop.f32.mrf.mxu0
    %v245 = vadd.f32 0.0, %v244
    %246 = vmatmul.f32.gmra.mxu0 %v84
    %v247 = vpop.f32.mrf.mxu0
    %v248 = vadd.f32 0.0, %v247
    %249 = vmatmul.f32.gmra.mxu0 %v87
    %v250 = vpop.f32.mrf.mxu0
    %v251 = vadd.f32 0.0, %v250
    %252 = vmatmul.f32.gmra.mxu0 %v90
    %v253 = vpop.f32.mrf.mxu0
    %v254 = vadd.f32 0.0, %v253
    %255 = vmatmul.f32.gmra.mxu0 %v93
    %v256 = vpop.f32.mrf.mxu0
    %v257 = vadd.f32 0.0, %v256
    %258 = vmatmul.f32.gmra.mxu0 %v96
    %v259 = vpop.f32.mrf.mxu0
    %v260 = vadd.f32 0.0, %v259
    %261 = vmatmul.f32.gmra.mxu0 %v99
    %v262 = vpop.f32.mrf.mxu0
    %v263 = vadd.f32 0.0, %v262
    %264 = vmatmul.f32.gmra.mxu0 %v102
    %v265 = vpop.f32.mrf.mxu0
    %v266 = vadd.f32 0.0, %v265
    %267 = vdwg.mxu0
    %v268 = vld [vmem:[%s5] sm:$0x1]
    %v270 = vperm.slane %v268, 0
    %vm272 = vcmask 261120
    %v274 = vsel %vm272, %v245, 0
    %v277 = vsel %vm272, %v248, 0
    %v280 = vsel %vm272, %v251, 0
    %v283 = vsel %vm272, %v254, 0
    %v286 = vsel %vm272, %v257, 0
    %v289 = vsel %vm272, %v260, 0
    %v292 = vsel %vm272, %v263, 0
    %v295 = vsel %vm272, %v266, 0
    %297 = vmatpush.msra.mxu0 0.0
    %298 = vmatpush.msra.mxu0 0.0
    %299 = vmatpush.msra.mxu0 0.0
    %300 = vmatpush.msra.mxu0 0.0
    %301 = vmatpush.msra.mxu0 0.0
    %302 = vmatpush.msra.mxu0 0.0
    %303 = vmatpush.msra.mxu0 0.0
    %304 = vmatpush.msra.mxu0 0.0
    %305 = vmatpush.msra.mxu0 0.0
    %306 = vmatpush.msra.mxu0 0.0
    %307 = vmatpush.msra.mxu0 0.0
    %308 = vmatpush.msra.mxu0 0.0
    %309 = vmatpush.msra.mxu0 %v226
    %310 = vmatpush.msra.mxu0 %v225
    %311 = vmatpush.msra.mxu0 %v224
    %312 = vmatpush.msra.mxu0 %v223
    %313 = vmatmul.f32.gmra.mxu0 %v274
    %v314 = vpop.f32.mrf.mxu0
    %v315 = vadd.f32 %v270, %v314
    %316 = vmatmul.f32.gmra.mxu0 %v277
    %v317 = vpop.f32.mrf.mxu0
    %v318 = vadd.f32 %v270, %v317
    %319 = vmatmul.f32.gmra.mxu0 %v280
    %v320 = vpop.f32.mrf.mxu0
    %v321 = vadd.f32 %v270, %v320
    %322 = vmatmul.f32.gmra.mxu0 %v283
    %v323 = vpop.f32.mrf.mxu0
    %v324 = vadd.f32 %v270, %v323
    %325 = vmatmul.f32.gmra.mxu0 %v286
    %v326 = vpop.f32.mrf.mxu0
    %v327 = vadd.f32 %v270, %v326
    %328 = vmatmul.f32.gmra.mxu0 %v289
    %v329 = vpop.f32.mrf.mxu0
    %v330 = vadd.f32 %v270, %v329
    %331 = vmatmul.f32.gmra.mxu0 %v292
    %v332 = vpop.f32.mrf.mxu0
    %v333 = vadd.f32 %v270, %v332
    %334 = vmatmul.f32.gmra.mxu0 %v295
    %v335 = vpop.f32.mrf.mxu0
    %v336 = vadd.f32 %v270, %v335
    %337 = vdwg.mxu0
    %v338 = vmax.f32 %v315, 0.0
    %v339 = vmax.f32 %v318, 0.0
    %v340 = vmax.f32 %v321, 0.0
    %v341 = vmax.f32 %v324, 0.0
    %v342 = vmax.f32 %v327, 0.0
    %v343 = vmax.f32 %v330, 0.0
    %v344 = vmax.f32 %v333, 0.0
    %v345 = vmax.f32 %v336, 0.0
    %346 = vmatpush.msra.mxu0 0.0
    %347 = vmatpush.msra.mxu0 0.0
    %348 = vmatpush.msra.mxu0 0.0
    %349 = vmatpush.msra.mxu0 0.0
    %350 = vmatpush.msra.mxu0 0.0
    %351 = vmatpush.msra.mxu0 0.0
    %352 = vmatpush.msra.mxu0 0.0
    %353 = vmatpush.msra.mxu0 0.0
    %354 = vmatpush.msra.mxu0 %v345
    %355 = vmatpush.msra.mxu0 %v344
    %356 = vmatpush.msra.mxu0 %v343
    %357 = vmatpush.msra.mxu0 %v342
    %358 = vmatpush.msra.mxu0 %v341
    %359 = vmatpush.msra.mxu0 %v340
    %360 = vmatpush.msra.mxu0 %v339
    %361 = vmatpush.msra.mxu0 %v338
    %362 = vmatmul.f32.gmra.mxu0 %v81
    %v363 = vpop.f32.mrf.mxu0
    %v364 = vadd.f32 0.0, %v363
    %365 = vmatmul.f32.gmra.mxu0 %v84
    %v366 = vpop.f32.mrf.mxu0
    %v367 = vadd.f32 0.0, %v366
    %368 = vmatmul.f32.gmra.mxu0 %v87
    %v369 = vpop.f32.mrf.mxu0
    %v370 = vadd.f32 0.0, %v369
    %371 = vmatmul.f32.gmra.mxu0 %v90
    %v372 = vpop.f32.mrf.mxu0
    %v373 = vadd.f32 0.0, %v372
    %374 = vmatmul.f32.gmra.mxu0 %v93
    %v375 = vpop.f32.mrf.mxu0
    %v376 = vadd.f32 0.0, %v375
    %377 = vmatmul.f32.gmra.mxu0 %v96
    %v378 = vpop.f32.mrf.mxu0
    %v379 = vadd.f32 0.0, %v378
    %380 = vmatmul.f32.gmra.mxu0 %v99
    %v381 = vpop.f32.mrf.mxu0
    %v382 = vadd.f32 0.0, %v381
    %383 = vmatmul.f32.gmra.mxu0 %v102
    %v384 = vpop.f32.mrf.mxu0
    %v385 = vadd.f32 0.0, %v384
    %386 = vdwg.mxu0
    %v387 = vld [vmem:[#allocation4] sm:$0xff]
    %v388 = vld [vmem:[#allocation4 + $0x8] sm:$0xff]
    %v389 = vld [vmem:[#allocation4 + $0x10] sm:$0xff]
    %v390 = vld [vmem:[#allocation4 + $0x18] sm:$0xff]
    %v391 = vld [vmem:[%s7] sm:$0x1]
    %v393 = vperm.slane %v391, 0
    %v396 = vsel %vm272, %v364, 0
    %v399 = vsel %vm272, %v367, 0
    %v402 = vsel %vm272, %v370, 0
    %v405 = vsel %vm272, %v373, 0
    %v408 = vsel %vm272, %v376, 0
    %v411 = vsel %vm272, %v379, 0
    %v414 = vsel %vm272, %v382, 0
    %v417 = vsel %vm272, %v385, 0
    %419 = vmatpush.msra.mxu0 0.0
    %420 = vmatpush.msra.mxu0 0.0
    %421 = vmatpush.msra.mxu0 0.0
    %422 = vmatpush.msra.mxu0 0.0
    %423 = vmatpush.msra.mxu0 0.0
    %424 = vmatpush.msra.mxu0 0.0
    %425 = vmatpush.msra.mxu0 0.0
    %426 = vmatpush.msra.mxu0 0.0
    %427 = vmatpush.msra.mxu0 0.0
    %428 = vmatpush.msra.mxu0 0.0
    %429 = vmatpush.msra.mxu0 0.0
    %430 = vmatpush.msra.mxu0 0.0
    %431 = vmatpush.msra.mxu0 %v390
    %432 = vmatpush.msra.mxu0 %v389
    %433 = vmatpush.msra.mxu0 %v388
    %434 = vmatpush.msra.mxu0 %v387
    %435 = vmatmul.f32.gmra.mxu0 %v396
    %v436 = vpop.f32.mrf.mxu0
    %v437 = vadd.f32 %v393, %v436
    %438 = vmatmul.f32.gmra.mxu0 %v399
    %v439 = vpop.f32.mrf.mxu0
    %v440 = vadd.f32 %v393, %v439
    %441 = vmatmul.f32.gmra.mxu0 %v402
    %v442 = vpop.f32.mrf.mxu0
    %v443 = vadd.f32 %v393, %v442
    %444 = vmatmul.f32.gmra.mxu0 %v405
    %v445 = vpop.f32.mrf.mxu0
    %v446 = vadd.f32 %v393, %v445
    %447 = vmatmul.f32.gmra.mxu0 %v408
    %v448 = vpop.f32.mrf.mxu0
    %v449 = vadd.f32 %v393, %v448
    %450 = vmatmul.f32.gmra.mxu0 %v411
    %v451 = vpop.f32.mrf.mxu0
    %v452 = vadd.f32 %v393, %v451
    %453 = vmatmul.f32.gmra.mxu0 %v414
    %v454 = vpop.f32.mrf.mxu0
    %v455 = vadd.f32 %v393, %v454
    %456 = vmatmul.f32.gmra.mxu0 %v417
    %v457 = vpop.f32.mrf.mxu0
    %v458 = vadd.f32 %v393, %v457
    %459 = vdwg.mxu0
    %460 = vst [vmem:[%s8] sm:$0xff] %v437
    %461 = vst [vmem:[%s8 + $0x8] sm:$0xff] %v440
    %462 = vst [vmem:[%s8 + $0x10] sm:$0xff] %v443
    %463 = vst [vmem:[%s8 + $0x18] sm:$0xff] %v446
    %464 = vst [vmem:[%s8 + $0x20] sm:$0xff] %v449
    %465 = vst [vmem:[%s8 + $0x28] sm:$0xff] %v452
    %466 = vst [vmem:[%s8 + $0x30] sm:$0xff] %v455
    %467 = vst [vmem:[%s8 + $0x38] sm:$0xff] %v458
    // Predicated region
    $region42: #{variational_gcn_encoder.1} parent=1 // pred_check
      _
    $region43: #{variational_gcn_encoder.1} parent=1 // pred_check_branch
      %469 = sbr.rel (0) target = $region45
    $region44: #{variational_gcn_encoder.1} parent=1 // pred_region
      _
    $region45: #{variational_gcn_encoder.1} parent=1 // pred_fallthru
      _
    // Predicated region
    $region46: #{variational_gcn_encoder.1} parent=1 // pred_check
      _
    $region47: #{variational_gcn_encoder.1} parent=1 // pred_check_branch
      %471 = sbr.rel (0) target = $region49
    $region48: #{variational_gcn_encoder.1} parent=1 // pred_region
      _
    $region49: #{variational_gcn_encoder.1} parent=1 // pred_fallthru
      _
    %472 = vsyncpa [#allocation3], 1
    %473 = vsyncpa [#allocation5], 1

</llo_original>
